<compile_context>
chip_gen: v7x
topology: tpu7x:2x2x1
jax: 0.10.0
libtpu: 0.0.40
codegen_flags: <defaults>
</compile_context>

<pallas_src>
import jax
import jax.numpy as jnp
from jax.experimental import pallas as pl
from jax.experimental.pallas import tpu as pltpu


def _round_up(x, m):
    return ((x + m - 1) // m) * m


def swgcn_kernel(adj_ref, fw_ref, b_ref, out_ref, acc_ref):
    k = pl.program_id(1)  # reduction axis (sentence tiles), last in the grid

    @pl.when(k == 0)
    def _():
        acc_ref[...] = jnp.zeros_like(acc_ref)

    # bf16 x bf16 -> f32 accumulation on the MXU.
    acc_ref[...] += jnp.dot(adj_ref[...], fw_ref[...],
                            preferred_element_type=jnp.float32)

    @pl.when(k == pl.num_programs(1) - 1)
    def _():
        out_ref[...] = (acc_ref[...] + b_ref[...]).astype(out_ref.dtype)


def swgcn_forward(adj, feat, weight, bias, *, tm=256, tk=512):
    """adj: (Nw, Ns) 0/1, feat: (Ns, Fin), weight: (Fout, Fin), bias: (Fout,).

    Returns (Nw, Fout) f32 = Linear(sum of incoming sentence features) for word nodes.
    """
    n_word, n_sent = adj.shape
    out_feats = weight.shape[0]

    # Re-associate: out = adj @ (feat @ W^T) + b.  Removes the (Nw, Fin)
    # intermediate and the second Nw-sized matmul entirely.
    fw = feat.astype(jnp.float32) @ weight.astype(jnp.float32).T  # (Ns, Fout)

    # Lane-dense output: pad Fout up to a multiple of 128.
    fout_p = _round_up(out_feats, 128)
    # Tile sizes clamped to the (padded) problem size; (8,128)-legal block shapes.
    tm = min(tm, _round_up(n_word, 8))
    tk = min(tk, _round_up(n_sent, 128))
    nw_p = _round_up(n_word, tm)
    ns_p = _round_up(n_sent, tk)

    # bf16 streamed operands (adjacency 0/1 is exactly representable), zero-padded
    # so the padded rows/cols contribute nothing to the sum.
    adj_p = jnp.zeros((nw_p, ns_p), jnp.bfloat16).at[:n_word, :n_sent].set(
        adj.astype(jnp.bfloat16))
    fw_p = jnp.zeros((ns_p, fout_p), jnp.bfloat16).at[:n_sent, :out_feats].set(
        fw.astype(jnp.bfloat16))
    b_p = jnp.zeros((1, fout_p), jnp.float32).at[:, :out_feats].set(
        bias.astype(jnp.float32).reshape(1, out_feats))

    grid = (nw_p // tm, ns_p // tk)

    cost = pl.CostEstimate(
        flops=2 * nw_p * ns_p * fout_p,
        transcendentals=0,
        bytes_accessed=(adj_p.size * 2            # adjacency streamed once
                        + fw_p.size * 2 * grid[0]  # FW re-fetched per Nw tile
                        + nw_p * fout_p * 4        # output
                        + fout_p * 4),             # bias
    )

    out_p = pl.pallas_call(
        swgcn_kernel,
        out_shape=jax.ShapeDtypeStruct((nw_p, fout_p), jnp.float32),
        grid_spec=pltpu.PrefetchScalarGridSpec(
            num_scalar_prefetch=0,
            grid=grid,
            in_specs=[
                # Adjacency: the only operand with no reuse — streamed per (i, k).
                pl.BlockSpec((tm, tk), lambda i, k: (i, k)),
                # FW: ignores the Nw axis, re-fetched only when k changes.
                pl.BlockSpec((tk, fout_p), lambda i, k: (k, 0)),
                # Bias: single resident block.
                pl.BlockSpec((1, fout_p), lambda i, k: (0, 0)),
            ],
            out_specs=pl.BlockSpec((tm, fout_p), lambda i, k: (i, 0)),
            scratch_shapes=[pltpu.VMEM((tm, fout_p), jnp.float32)],
        ),
        compiler_params=pltpu.CompilerParams(
            dimension_semantics=("parallel", "arbitrary")),
        cost_estimate=cost,
    )(adj_p, fw_p, b_p)

    # Rows of `adj` are the word nodes -> this slice is the `[wnode_id]` selection.
    return out_p[:n_word, :out_feats]


if __name__ == "__main__":
    # Small synthetic graph: 48 word nodes, 200 sentence nodes (non-tile-aligned
    # on purpose to exercise the padding / pl.when edges).
    n_word, n_sent = 48, 200
    in_feats, out_feats = 32, 32

    key = jax.random.PRNGKey(0)
    k_adj, k_feat, k_w, k_b = jax.random.split(key, 4)

    # Dense sentence->word adjacency (0/1). Word->sentence edges contribute zero
    # messages to word nodes, so they are omitted from the dense form.
    adj = (jax.random.uniform(k_adj, (n_word, n_sent)) < 0.4).astype(jnp.float32)
    feat = jax.random.normal(k_feat, (n_sent, in_feats), dtype=jnp.float32)

    # Deterministic nn.Linear-style init (uniform in +/- 1/sqrt(in_feats)).
    bound = 1.0 / (in_feats ** 0.5)
    weight = jax.random.uniform(k_w, (out_feats, in_feats), minval=-bound,
                                maxval=bound, dtype=jnp.float32)
    bias = jax.random.uniform(k_b, (out_feats,), minval=-bound, maxval=bound,
                              dtype=jnp.float32)

    # Pure-JAX f32 reference of the original module's forward semantics.
    ref = (adj @ feat) @ weight.T + bias

    # Default (large) tiles.
    out = jax.block_until_ready(swgcn_forward(adj, feat, weight, bias))
    assert out.shape == (n_word, out_feats)
    assert jnp.allclose(out, ref, atol=5e-2, rtol=5e-2), float(
        jnp.max(jnp.abs(out - ref)))

    # Small tiles: multi-step K reduction (2 sentence tiles) and 3 word tiles —
    # exercises the accumulator init/finalize and the zero-padded edge tiles.
    out_small = jax.block_until_ready(
        swgcn_forward(adj, feat, weight, bias, tm=16, tk=128))
    assert out_small.shape == (n_word, out_feats)
    assert jnp.allclose(out_small, ref, atol=5e-2, rtol=5e-2), float(
        jnp.max(jnp.abs(out_small - ref)))

    print("KERNEL_OK")
</pallas_src>

<mosaic_0001>
module attributes {stable_mosaic.version = 11 : i64} {
  func.func @swgcn_kernel(%arg0: i32, %arg1: i32, %arg2: memref<48x256xbf16, #tpu.memory_space<vmem>>, %arg3: memref<256x128xbf16, #tpu.memory_space<vmem>>, %arg4: memref<1x128xf32, #tpu.memory_space<vmem>>, %arg5: memref<48x128xf32, #tpu.memory_space<vmem>>, %arg6: memref<48x128xf32, #tpu.memory_space<vmem>>) attributes {dimension_semantics = [#tpu.dimension_semantics<parallel>, #tpu.dimension_semantics<arbitrary>], iteration_bounds = array<i64: 1, 1>, scalar_prefetch = 0 : i64, scratch_operands = 1 : i64, tpu.core_type = #tpu.core_type<tc>, window_params = [{transform_indices = @transform_0, window_bounds = array<i64: 48, 256>}, {transform_indices = @transform_1, window_bounds = array<i64: 256, 128>}, {pipeline_mode = #tpu.pipeline_mode<synchronous>, transform_indices = @transform_2, window_bounds = array<i64: 1, 128>}, {transform_indices = @transform_3, window_bounds = array<i64: 48, 128>}]} {
    %c0_i32 = arith.constant 0 : i32
    %0 = arith.cmpi eq, %arg1, %c0_i32 : i32
    %1 = arith.extui %0 : i1 to i32
    %c0_i32_0 = arith.constant 0 : i32
    %2 = arith.cmpi ne, %1, %c0_i32_0 : i32
    scf.if %2 {
      %cst_10 = arith.constant 0.000000e+00 : f32
      %12 = vector.broadcast %cst_10 : f32 to vector<48x128xf32>
      %c0_11 = arith.constant 0 : index
      %c0_12 = arith.constant 0 : index
      %13 = vector.load %arg6[%c0_11, %c0_12] : memref<48x128xf32, #tpu.memory_space<vmem>>, vector<48x128xf32>
      tpu.vector_store %arg6[%c0_11, %c0_12], %12 {strides = array<i32>} : memref<48x128xf32, #tpu.memory_space<vmem>>, vector<48x128xf32>,
    } else {
    }
    %c0 = arith.constant 0 : index
    %c0_1 = arith.constant 0 : index
    %3 = vector.load %arg6[%c0, %c0_1] : memref<48x128xf32, #tpu.memory_space<vmem>>, vector<48x128xf32>
    %c0_2 = arith.constant 0 : index
    %c0_3 = arith.constant 0 : index
    %4 = vector.load %arg2[%c0_2, %c0_3] : memref<48x256xbf16, #tpu.memory_space<vmem>>, vector<48x256xbf16>
    %c0_4 = arith.constant 0 : index
    %c0_5 = arith.constant 0 : index
    %5 = vector.load %arg3[%c0_4, %c0_5] : memref<256x128xbf16, #tpu.memory_space<vmem>>, vector<256x128xbf16>
    %cst = arith.constant dense<0.000000e+00> : vector<48x128xf32>
    %6 = tpu.matmul %4, %5, %cst {dimension_numbers = #tpu.dot_dimension_numbers<[1], [0], [0], [1], [0, 0, 1, 1], [], []>} : vector<48x256xbf16>, vector<256x128xbf16>, vector<48x128xf32> -> vector<48x128xf32>
    %7 = arith.addf %3, %6 : vector<48x128xf32>
    %c0_6 = arith.constant 0 : index
    %c0_7 = arith.constant 0 : index
    %8 = vector.load %arg6[%c0_6, %c0_7] : memref<48x128xf32, #tpu.memory_space<vmem>>, vector<48x128xf32>
    tpu.vector_store %arg6[%c0_6, %c0_7], %7 {strides = array<i32>} : memref<48x128xf32, #tpu.memory_space<vmem>>, vector<48x128xf32>,
    %c0_i32_8 = arith.constant 0 : i32
    %9 = arith.cmpi eq, %arg1, %c0_i32_8 : i32
    %10 = arith.extui %9 : i1 to i32
    %c0_i32_9 = arith.constant 0 : i32
    %11 = arith.cmpi ne, %10, %c0_i32_9 : i32
    scf.if %11 {
      %c0_10 = arith.constant 0 : index
      %c0_11 = arith.constant 0 : index
      %12 = vector.load %arg6[%c0_10, %c0_11] : memref<48x128xf32, #tpu.memory_space<vmem>>, vector<48x128xf32>
      %c0_12 = arith.constant 0 : index
      %c0_13 = arith.constant 0 : index
      %13 = vector.load %arg4[%c0_12, %c0_13] : memref<1x128xf32, #tpu.memory_space<vmem>>, vector<1x128xf32>
      %14 = vector.broadcast %13 : vector<1x128xf32> to vector<48x128xf32>
      %15 = arith.addf %12, %14 : vector<48x128xf32>
      %c0_14 = arith.constant 0 : index
      %c0_15 = arith.constant 0 : index
      %16 = vector.load %arg5[%c0_14, %c0_15] : memref<48x128xf32, #tpu.memory_space<vmem>>, vector<48x128xf32>
      tpu.vector_store %arg5[%c0_14, %c0_15], %15 {strides = array<i32>} : memref<48x128xf32, #tpu.memory_space<vmem>>, vector<48x128xf32>,
    } else {
    }
    return
  }
  func.func @transform_0(%arg0: i32, %arg1: i32) -> (i32, i32) {
    %c0_i32 = arith.constant 0 : i32
    return %arg0, %arg1 : i32, i32
  }
  func.func @transform_1(%arg0: i32, %arg1: i32) -> (i32, i32) {
    %c0_i32 = arith.constant 0 : i32
    %c0_i32_0 = arith.constant 0 : i32
    return %arg1, %c0_i32 : i32, i32
  }
  func.func @transform_2(%arg0: i32, %arg1: i32) -> (i32, i32) {
    %c0_i32 = arith.constant 0 : i32
    %c0_i32_0 = arith.constant 0 : i32
    %c0_i32_1 = arith.constant 0 : i32
    return %c0_i32, %c0_i32_0 : i32, i32
  }
  func.func @transform_3(%arg0: i32, %arg1: i32) -> (i32, i32) {
    %c0_i32 = arith.constant 0 : i32
    %c0_i32_0 = arith.constant 0 : i32
    return %arg0, %c0_i32 : i32, i32
  }
}

</mosaic_0001>

<llo_original>
// kernel: tpu_custom_call.1
$region0: #{tpu_custom_call.1}
  #allocation0 [shape = 'u32[]', space=smem, size = 0x4, offset = 0x4, fixed_abs, tag = 'smem constant byte address 0x4 - core index']
  #allocation1 [shape = 'u32[144,128]{1,0:T(1,128)}', space=vmem, size = 0x12000, scoped, tag = 'internal scratch']
  #allocation2 [shape = 'f32[48,128]{1,0:T(8,128)}', space=vmem, size = 0x6000, scoped, tag = 'scratch operand']
  %s0 = inlined_call_operand.hbm [shape: bf16[48,256], index: 0, kind: input, shape index: {}]
  %s1 = inlined_call_operand.hbm [shape: bf16[256,128], index: 1, kind: input, shape index: {}]
  %s2 = inlined_call_operand.vmem [shape: f32[1,128], index: 2, kind: input, shape index: {}]
  %s3 = inlined_call_operand.hbm [shape: f32[48,128], index: 3, kind: output, shape index: {}]
  %s4 = sld [smem:[#allocation0]]
  $region38: #{tpu_custom_call.1} parent=0
    _
  %s6 = ssub.s32 1, %s4
  %s7 = scalar_select 0, %s6, %s4
  $region1: #{tpu_custom_call.1} parent=0
    #allocation3 [shape = 'u8[24576]{0}', space=vmem, size = 0x6000, scoped, tag = 'input window, operand 0, single buffered']
    #allocation4 [shape = 's32[1]{0}', space=sflag, size = 0x4, scoped, tag = 'scoped memory for tpu_custom_call.1']
    #allocation5 [shape = 's32[1]{0}', space=sflag, size = 0x4, scoped, tag = 'scoped memory for tpu_custom_call.1']
    #allocation6 [shape = 'u8[65536]{0}', space=vmem, size = 0x10000, scoped, tag = 'input window, operand 1, single buffered']
    #allocation7 [shape = 's32[1]{0}', space=sflag, size = 0x4, scoped, tag = 'scoped memory for tpu_custom_call.1']
    #allocation8 [shape = 'u8[24576]{0}', space=vmem, size = 0x6000, scoped, tag = 'output window, operand 0, single buffered']
    %8 = vsyncpa [#allocation4], 0
    %9 = vsyncpa [#allocation7], 0
    %10 = vsyncpa [#allocation5], 0
    // Predicated region
    $region2: #{tpu_custom_call.1} parent=1 // pred_check
      _
    $region3: #{tpu_custom_call.1} parent=1 // pred_check_branch
      %12 = sbr.rel (0) target = $region5
    $region4: #{tpu_custom_call.1} parent=1 // pred_region
      %s14 = ssub.s32 768, 768
      %15 = vsyncadd [#allocation4], %s14
      %s16 = sshll.u32 [#allocation3], 4
      %s17 = int_to_ptr.vmem [resolvable:$true] %s16
      %22 = dma.hbm_to_vmem [thread:$0]  %s0, 768, %s17, [#allocation4], 128, 128, 8
    $region5: #{tpu_custom_call.1} parent=1 // pred_fallthru
      _
    // Predicated region
    $region6: #{tpu_custom_call.1} parent=1 // pred_check
      _
    $region7: #{tpu_custom_call.1} parent=1 // pred_check_branch
      %24 = sbr.rel (0) target = $region9
    $region8: #{tpu_custom_call.1} parent=1 // pred_region
      %s26 = ssub.s32 2048, 2048
      %27 = vsyncadd [#allocation7], %s26
      %s28 = sshll.u32 [#allocation6], 4
      %s29 = int_to_ptr.vmem [resolvable:$true] %s28
      %34 = dma.hbm_to_vmem [thread:$0]  %s1, 2048, %s29, [#allocation7], 64, 64, 4
    $region9: #{tpu_custom_call.1} parent=1 // pred_fallthru
      _
    // Predicated region
    $region10: #{tpu_custom_call.1} parent=1 // pred_check
      _
    $region11: #{tpu_custom_call.1} parent=1 // pred_check_branch
      %36 = sbr.rel (0) target = $region13
    $region12: #{tpu_custom_call.1} parent=1 // pred_region
      _
    $region13: #{tpu_custom_call.1} parent=1 // pred_fallthru
      _
    // Predicated region
    $region14: #{tpu_custom_call.1} parent=1 // pred_check
      _
    $region15: #{tpu_custom_call.1} parent=1 // pred_check_branch
      %38 = sbr.rel (0) target = $region17
    $region16: #{tpu_custom_call.1} parent=1 // pred_region
      %39 = dma.done [#allocation4], 768
    $region17: #{tpu_custom_call.1} parent=1 // pred_fallthru
      _
    // Predicated region
    $region18: #{tpu_custom_call.1} parent=1 // pred_check
      _
    $region19: #{tpu_custom_call.1} parent=1 // pred_check_branch
      %41 = sbr.rel (0) target = $region21
    $region20: #{tpu_custom_call.1} parent=1 // pred_region
      %42 = dma.done [#allocation7], 2048
    $region21: #{tpu_custom_call.1} parent=1 // pred_fallthru
      _
    %p44 = scmp.eq.s32.totalorder 0, 0
    // Predicated region
    $region22: #{tpu_custom_call.1} parent=1 // pred_check
      %p45 = pneg %p44
    $region23: #{tpu_custom_call.1} parent=1 // pred_check_branch
      %47 = sbr.rel (%p45) target = $region25
    $region24: #{tpu_custom_call.1} parent=1 // pred_region
      %48 = vst [vmem:[#allocation2] sm:$0xff] 0.0
      %49 = vst [vmem:[#allocation2 + $0x8] sm:$0xff] 0.0
      %50 = vst [vmem:[#allocation2 + $0x10] sm:$0xff] 0.0
      %51 = vst [vmem:[#allocation2 + $0x18] sm:$0xff] 0.0
      %52 = vst [vmem:[#allocation2 + $0x20] sm:$0xff] 0.0
      %53 = vst [vmem:[#allocation2 + $0x28] sm:$0xff] 0.0
    $region25: #{tpu_custom_call.1} parent=1 // pred_fallthru
      _
    %v54 = vld [vmem:[#allocation2] sm:$0xff]
    %v55 = vld [vmem:[#allocation2 + $0x8] sm:$0xff]
    %v56 = vld [vmem:[#allocation2 + $0x10] sm:$0xff]
    %v57 = vld [vmem:[#allocation2 + $0x18] sm:$0xff]
    %v58 = vld [vmem:[#allocation2 + $0x20] sm:$0xff]
    %v59 = vld [vmem:[#allocation2 + $0x28] sm:$0xff]
    %v60 = vld [vmem:[#allocation3] sm:$0xff]
    %v61 = vld [vmem:[#allocation3 + $0x8] sm:$0xff]
    %v62 = vld [vmem:[#allocation3 + $0x10] sm:$0xff]
    %v63 = vld [vmem:[#allocation3 + $0x18] sm:$0xff]
    %v64 = vld [vmem:[#allocation3 + $0x20] sm:$0xff]
    %v65 = vld [vmem:[#allocation3 + $0x28] sm:$0xff]
    %v66 = vld [vmem:[#allocation6] sm:$0xf]
    %v67 = vld [vmem:[#allocation6 + $0x4] sm:$0xf]
    %v68 = vld [vmem:[#allocation6 + $0x8] sm:$0xf]
    %v69 = vld [vmem:[#allocation6 + $0xc] sm:$0xf]
    %v70 = vld [vmem:[#allocation6 + $0x10] sm:$0xf]
    %v71 = vld [vmem:[#allocation6 + $0x14] sm:$0xf]
    %v72 = vld [vmem:[#allocation6 + $0x18] sm:$0xf]
    %v73 = vld [vmem:[#allocation6 + $0x1c] sm:$0xf]
    %v74 = vld [vmem:[#allocation6 + $0x20] sm:$0xf]
    %v75 = vld [vmem:[#allocation6 + $0x24] sm:$0xf]
    %v76 = vld [vmem:[#allocation6 + $0x28] sm:$0xf]
    %v77 = vld [vmem:[#allocation6 + $0x2c] sm:$0xf]
    %v78 = vld [vmem:[#allocation6 + $0x30] sm:$0xf]
    %v79 = vld [vmem:[#allocation6 + $0x34] sm:$0xf]
    %v80 = vld [vmem:[#allocation6 + $0x38] sm:$0xf]
    %v81 = vld [vmem:[#allocation6 + $0x3c] sm:$0xf]
    %v82 = vld [vmem:[#allocation6 + $0x40] sm:$0xf]
    %v83 = vld [vmem:[#allocation6 + $0x44] sm:$0xf]
    %v84 = vld [vmem:[#allocation6 + $0x48] sm:$0xf]
    %v85 = vld [vmem:[#allocation6 + $0x4c] sm:$0xf]
    %v86 = vld [vmem:[#allocation6 + $0x50] sm:$0xf]
    %v87 = vld [vmem:[#allocation6 + $0x54] sm:$0xf]
    %v88 = vld [vmem:[#allocation6 + $0x58] sm:$0xf]
    %v89 = vld [vmem:[#allocation6 + $0x5c] sm:$0xf]
    %v90 = vld [vmem:[#allocation6 + $0x60] sm:$0xf]
    %v91 = vld [vmem:[#allocation6 + $0x64] sm:$0xf]
    %v92 = vld [vmem:[#allocation6 + $0x68] sm:$0xf]
    %v93 = vld [vmem:[#allocation6 + $0x6c] sm:$0xf]
    %v94 = vld [vmem:[#allocation6 + $0x70] sm:$0xf]
    %v95 = vld [vmem:[#allocation6 + $0x74] sm:$0xf]
    %v96 = vld [vmem:[#allocation6 + $0x78] sm:$0xf]
    %v97 = vld [vmem:[#allocation6 + $0x7c] sm:$0xf]
    %v104 = vunpack.c.l.b16 %v60
    %v105 = vunpack.c.h.b16 %v60
    %v106 = vunpack.c.l.b16 %v61
    %v107 = vunpack.c.h.b16 %v61
    %v108 = vunpack.c.l.b16 %v62
    %v109 = vunpack.c.h.b16 %v62
    %v110 = vunpack.c.l.b16 %v63
    %v111 = vunpack.c.h.b16 %v63
    %v112 = vunpack.c.l.b16 %v64
    %v113 = vunpack.c.h.b16 %v64
    %v114 = vunpack.c.l.b16 %v65
    %v115 = vunpack.c.h.b16 %v65
    %v116 = vpack.c.b16 %v106, %v104
    %v117 = vpack.c.b16 %v107, %v105
    %v118 = vpack.c.b16 %v110, %v108
    %v119 = vpack.c.b16 %v111, %v109
    %v120 = vpack.c.b16 %v114, %v112
    %v121 = vpack.c.b16 %v115, %v113
    %v160 = vunpack.c.l.b16 %v66
    %v161 = vunpack.c.l.b16 %v67
    %v162 = vunpack.c.l.b16 %v68
    %v163 = vunpack.c.l.b16 %v69
    %v164 = vunpack.c.l.b16 %v70
    %v165 = vunpack.c.l.b16 %v71
    %v166 = vunpack.c.l.b16 %v72
    %v167 = vunpack.c.l.b16 %v73
    %v168 = vunpack.c.l.b16 %v74
    %v169 = vunpack.c.l.b16 %v75
    %v170 = vunpack.c.l.b16 %v76
    %v171 = vunpack.c.l.b16 %v77
    %v172 = vunpack.c.l.b16 %v78
    %v173 = vunpack.c.l.b16 %v79
    %v174 = vunpack.c.l.b16 %v80
    %v175 = vunpack.c.l.b16 %v81
    %v176 = vunpack.c.l.b16 %v82
    %v177 = vunpack.c.l.b16 %v83
    %v178 = vunpack.c.l.b16 %v84
    %v179 = vunpack.c.l.b16 %v85
    %v180 = vunpack.c.l.b16 %v86
    %v181 = vunpack.c.l.b16 %v87
    %v182 = vunpack.c.l.b16 %v88
    %v183 = vunpack.c.l.b16 %v89
    %v184 = vunpack.c.l.b16 %v90
    %v185 = vunpack.c.l.b16 %v91
    %v186 = vunpack.c.l.b16 %v92
    %v187 = vunpack.c.l.b16 %v93
    %v188 = vunpack.c.l.b16 %v94
    %v189 = vunpack.c.l.b16 %v95
    %v190 = vunpack.c.l.b16 %v96
    %v191 = vunpack.c.l.b16 %v97
    %v192 = vpack.c.b16 %v161, %v160
    %v193 = vpack.c.b16 %v163, %v162
    %v194 = vpack.c.b16 %v165, %v164
    %v195 = vpack.c.b16 %v167, %v166
    %v196 = vpack.c.b16 %v169, %v168
    %v197 = vpack.c.b16 %v171, %v170
    %v198 = vpack.c.b16 %v173, %v172
    %v199 = vpack.c.b16 %v175, %v174
    %v200 = vpack.c.b16 %v177, %v176
    %v201 = vpack.c.b16 %v179, %v178
    %v202 = vpack.c.b16 %v181, %v180
    %v203 = vpack.c.b16 %v183, %v182
    %v204 = vpack.c.b16 %v185, %v184
    %v205 = vpack.c.b16 %v187, %v186
    %v206 = vpack.c.b16 %v189, %v188
    %v207 = vpack.c.b16 %v191, %v190
    %224 = vmatprep.subr.bf16.mxu0 0
    %225 = vmatpush1.bf16.msra.mxu0 %v192
    %226 = vmatprep.subr.bf16.mxu0 0
    %227 = vmatpush1.bf16.msra.mxu0 %v193
    %228 = vmatprep.subr.bf16.mxu0 0
    %229 = vmatpush1.bf16.msra.mxu0 %v194
    %230 = vmatprep.subr.bf16.mxu0 0
    %231 = vmatpush1.bf16.msra.mxu0 %v195
    %232 = vmatprep.subr.bf16.mxu0 0
    %233 = vmatpush1.bf16.msra.mxu0 %v196
    %234 = vmatprep.subr.bf16.mxu0 0
    %235 = vmatpush1.bf16.msra.mxu0 %v197
    %236 = vmatprep.subr.bf16.mxu0 0
    %237 = vmatpush1.bf16.msra.mxu0 %v198
    %238 = vmatprep.subr.bf16.mxu0 0
    %239 = vmatpush1.bf16.msra.mxu0 %v199
    %240 = vmatprep.subr.bf16.mxu0 0
    %241 = vmatpush1.bf16.msra.mxu0 %v200
    %242 = vmatprep.subr.bf16.mxu0 0
    %243 = vmatpush1.bf16.msra.mxu0 %v201
    %244 = vmatprep.subr.bf16.mxu0 0
    %245 = vmatpush1.bf16.msra.mxu0 %v202
    %246 = vmatprep.subr.bf16.mxu0 0
    %247 = vmatpush1.bf16.msra.mxu0 %v203
    %248 = vmatprep.subr.bf16.mxu0 0
    %249 = vmatpush1.bf16.msra.mxu0 %v204
    %250 = vmatprep.subr.bf16.mxu0 0
    %251 = vmatpush1.bf16.msra.mxu0 %v205
    %252 = vmatprep.subr.bf16.mxu0 0
    %253 = vmatpush1.bf16.msra.mxu0 %v206
    %254 = vmatprep.subr.bf16.mxu0 0
    %255 = vmatpush1.bf16.msra.mxu0 %v207
    %256 = vmatprep.mubr.bf16.mxu0 %v117
    %257 = vmatmul.mubr.bf16.gmra.mrb[0].mxu0 %v116
    %v258 = vpop.f32.mrb[0].mxu0
    %v259 = vadd.f32 0.0, %v258
    %v260 = vpop.f32.mrb[0].mxu0
    %v261 = vpop.f32.mrb[0].mxu0
    %v262 = vadd.f32 0.0, %v261
    %v263 = vpop.f32.mrb[0].mxu0
    %264 = vmatprep.mubr.bf16.mxu0 %v119
    %265 = vmatmul.mubr.bf16.gmra.mrb[0].mxu0 %v118
    %v266 = vpop.f32.mrb[0].mxu0
    %v267 = vadd.f32 0.0, %v266
    %v268 = vpop.f32.mrb[0].mxu0
    %v269 = vpop.f32.mrb[0].mxu0
    %v270 = vadd.f32 0.0, %v269
    %v271 = vpop.f32.mrb[0].mxu0
    %272 = vmatprep.mubr.bf16.mxu0 %v121
    %273 = vmatmul.mubr.bf16.gmra.mrb[0].mxu0 %v120
    %v274 = vpop.f32.mrb[0].mxu0
    %v275 = vadd.f32 0.0, %v274
    %v276 = vpop.f32.mrb[0].mxu0
    %v277 = vpop.f32.mrb[0].mxu0
    %v278 = vadd.f32 0.0, %v277
    %v279 = vpop.f32.mrb[0].mxu0
    %280 = vdwg.mxu0
    %v281 = vadd.f32 %v54, %v259
    %v282 = vadd.f32 %v55, %v262
    %v283 = vadd.f32 %v56, %v267
    %v284 = vadd.f32 %v57, %v270
    %v285 = vadd.f32 %v58, %v275
    %v286 = vadd.f32 %v59, %v278
    %287 = vst [vmem:[#allocation2] sm:$0xff] %v281
    %288 = vst [vmem:[#allocation2 + $0x8] sm:$0xff] %v282
    %289 = vst [vmem:[#allocation2 + $0x10] sm:$0xff] %v283
    %290 = vst [vmem:[#allocation2 + $0x18] sm:$0xff] %v284
    %291 = vst [vmem:[#allocation2 + $0x20] sm:$0xff] %v285
    %292 = vst [vmem:[#allocation2 + $0x28] sm:$0xff] %v286
    // Predicated region
    $region26: #{tpu_custom_call.1} parent=1 // pred_check
      %p293 = pneg %p44
    $region27: #{tpu_custom_call.1} parent=1 // pred_check_branch
      %295 = sbr.rel (%p293) target = $region29
    $region28: #{tpu_custom_call.1} parent=1 // pred_region
      %v296 = vld [vmem:[#allocation2] sm:$0xff]
      %v297 = vld [vmem:[#allocation2 + $0x8] sm:$0xff]
      %v298 = vld [vmem:[#allocation2 + $0x10] sm:$0xff]
      %v299 = vld [vmem:[#allocation2 + $0x18] sm:$0xff]
      %v300 = vld [vmem:[#allocation2 + $0x20] sm:$0xff]
      %v301 = vld [vmem:[#allocation2 + $0x28] sm:$0xff]
      %v302 = vld [vmem:[%s2] sm:$0x1]
      %v304 = vlaneseq
      %v305 = vshrl.u32 %v304, 7
      %v306 = vsub.s32 0, %v305
      %v307 = vrot.slane %v302, %v306
      %v309 = vadd.f32 %v296, %v307
      %v310 = vadd.f32 %v297, %v307
      %v311 = vadd.f32 %v298, %v307
      %v312 = vadd.f32 %v299, %v307
      %v313 = vadd.f32 %v300, %v307
      %v314 = vadd.f32 %v301, %v307
      %315 = vst [vmem:[#allocation8] sm:$0xff] %v309
      %316 = vst [vmem:[#allocation8 + $0x8] sm:$0xff] %v310
      %317 = vst [vmem:[#allocation8 + $0x10] sm:$0xff] %v311
      %318 = vst [vmem:[#allocation8 + $0x18] sm:$0xff] %v312
      %319 = vst [vmem:[#allocation8 + $0x20] sm:$0xff] %v313
      %320 = vst [vmem:[#allocation8 + $0x28] sm:$0xff] %v314
    $region29: #{tpu_custom_call.1} parent=1 // pred_fallthru
      _
    // Predicated region
    $region30: #{tpu_custom_call.1} parent=1 // pred_check
      _
    $region31: #{tpu_custom_call.1} parent=1 // pred_check_branch
      %322 = sbr.rel (0) target = $region33
    $region32: #{tpu_custom_call.1} parent=1 // pred_region
      %s324 = ssub.s32 768, 768
      %325 = vsyncadd [#allocation5], %s324
      %s326 = sshll.u32 [#allocation8], 4
      %s327 = int_to_ptr.vmem [resolvable:$true] %s326
      %332 = dma.vmem_to_hbm [thread:$0]  %s327, 768, %s3, [#allocation5], 128, 128, 8
    $region33: #{tpu_custom_call.1} parent=1 // pred_fallthru
      _
    // Predicated region
    $region34: #{tpu_custom_call.1} parent=1 // pred_check
      _
    $region35: #{tpu_custom_call.1} parent=1 // pred_check_branch
      %334 = sbr.rel (0) target = $region37
    $region36: #{tpu_custom_call.1} parent=1 // pred_region
      %335 = dma.done [#allocation5], 768
    $region37: #{tpu_custom_call.1} parent=1 // pred_fallthru
      _
    %336 = vsyncpa [#allocation4], 1
    %337 = vsyncpa [#allocation7], 1
    %338 = vsyncpa [#allocation5], 1

</llo_original>
